<compile_context>
chip_gen: v7x
topology: tpu7x:2x2x1
jax: 0.10.0
libtpu: 0.0.40
codegen_flags: <defaults>
</compile_context>

<pallas_src>
import numpy as np
import jax
import jax.numpy as jnp
from jax.experimental import pallas as pl
from jax.experimental.pallas import tpu as pltpu


# ---------------------------------------------------------------------------
# Tunables
# ---------------------------------------------------------------------------
_VMEM_TILE_BUDGET = 36 * 1024 * 1024   # target VMEM footprint for tiles (bytes)
_BF16_K_CHUNK = 512                    # bf16/f32 path: 512*127*128 < 2**23 -> exact f32 sums


def _round_up(v, m):
    return ((v + m - 1) // m) * m


def _pick_tile(dim, preferred, floor):
    """Largest power-of-two tile <= preferred that divides dim (>= floor);
    falls back to the full dim (a full-extent block is always legal)."""
    if dim <= preferred:
        return dim
    t = preferred
    while t >= floor:
        if dim % t == 0:
            return t
        t //= 2
    return dim


def _use_bf16_mxu():
    # v7x has no integer MXU path; v5e/v6e do.
    try:
        kind = jax.devices()[0].device_kind.lower()
    except Exception:  # pragma: no cover
        kind = ""
    return ("v7" in kind) or ("7x" in kind)


def _tile_footprint(tm, tn, tk, tiled, use_bf16):
    """Approximate VMEM bytes for one grid step (double-buffered operands)."""
    b = 2 * tm * tk          # x tile, int8, double-buffered
    b += 2 * tk * tn         # wT tile, int8, double-buffered
    b += 2 * 4 * tn * 4      # packed params, int32, double-buffered
    b += 2 * tm * tn         # int8/uint8 output tile, double-buffered
    if tiled:
        b += tm * tn * 4     # int32 accumulator scratch
    if use_bf16:
        b += tm * tn * 4     # in-kernel f32 partial accumulator
    return b


def _choose_tiles(B, N_pad, K_pad, use_bf16, tile_m, tile_n, tile_k):
    """Returns (tm, tn, tk, single_pass)."""
    tm = tile_m if tile_m is not None else _pick_tile(B, 512, 8)
    tn = tile_n if tile_n is not None else _pick_tile(N_pad, 512, 128)

    if tile_n is None:
        # v7x has 2 TensorCores; keep >= 2 "parallel" grid points so both work.
        while (B // tm) * (N_pad // tn) < 2 and tn > 128 and N_pad % (tn // 2) == 0:
            tn //= 2

    if tile_k is not None and tile_k < K_pad:
        return tm, tn, tile_k, False

    # Prefer single-pass (tk == K): accumulation stays inside the MXU, no per-k
    # int32 accumulator read-modify-write in VMEM, no K grid axis.
    s_tm, s_tn = tm, tn
    while (_tile_footprint(s_tm, s_tn, K_pad, False, use_bf16) > _VMEM_TILE_BUDGET
           and s_tn > 128 and N_pad % (s_tn // 2) == 0):
        s_tn //= 2
    while (_tile_footprint(s_tm, s_tn, K_pad, False, use_bf16) > _VMEM_TILE_BUDGET
           and s_tm > 8 and s_tm % 2 == 0 and B % (s_tm // 2) == 0
           and (s_tm // 2) % 8 == 0):
        s_tm //= 2
    if _tile_footprint(s_tm, s_tn, K_pad, False, use_bf16) <= _VMEM_TILE_BUDGET:
        return s_tm, s_tn, K_pad, True

    # Fallback: K-tiled with the largest tk that fits the budget.
    tk = _pick_tile(K_pad, 2048, 128)
    while (_tile_footprint(tm, tn, tk, True, use_bf16) > _VMEM_TILE_BUDGET
           and tk > 128 and K_pad % (tk // 2) == 0):
        tk //= 2
    return tm, tn, tk, False


# ---------------------------------------------------------------------------
# Kernels
# ---------------------------------------------------------------------------
def _int8_tile_dot(x_ref, wT_ref, use_bf16_mxu):
    """int8 x int8 -> int32 tile dot.
    v5e/v6e: native integer MXU.  v7x: bf16 inputs + f32 accumulation in
    <=512-wide K chunks (exact: every partial sum is an integer with
    |sum| <= 512*127*128 < 2**23 < 2**24), converted to int32 exactly once."""
    if not use_bf16_mxu:
        return jnp.dot(x_ref[...], wT_ref[...], preferred_element_type=jnp.int32)
    K = x_ref.shape[1]
    accf = None
    for s in range(0, K, _BF16_K_CHUNK):
        e = min(s + _BF16_K_CHUNK, K)
        part = jnp.dot(x_ref[:, s:e].astype(jnp.bfloat16),
                       wT_ref[s:e, :].astype(jnp.bfloat16),
                       preferred_element_type=jnp.float32)
        accf = part if accf is None else accf + part
    return accf.astype(jnp.int32)


def _epilogue(acc, p_ref, o_ref):
    acc = acc + p_ref[0:1, :]                      # + t
    acc = jnp.right_shift(acc, p_ref[1:2, :])      # >> (-n), arithmetic (signed)
    acc = jnp.clip(acc, p_ref[2:3, :], p_ref[3:4, :])
    o_ref[...] = acc.astype(o_ref.dtype)           # fused narrow cast (int8/uint8)


def _make_single_pass_kernel(use_bf16_mxu):
    # Grid (B//tm, N//tn); full-K strips -> no accumulator, no K axis.
    def kernel(x_ref, wT_ref, p_ref, o_ref):
        _epilogue(_int8_tile_dot(x_ref, wT_ref, use_bf16_mxu), p_ref, o_ref)
    return kernel


def _make_ktiled_kernel(use_bf16_mxu):
    # Grid (B//tm, N//tn, K//tk); int32 VMEM accumulator across the K axis.
    def kernel(x_ref, wT_ref, p_ref, o_ref, acc_ref):
        k = pl.program_id(2)

        @pl.when(k == 0)
        def _init():
            acc_ref[...] = jnp.zeros_like(acc_ref)

        acc_ref[...] += _int8_tile_dot(x_ref, wT_ref, use_bf16_mxu)

        @pl.when(k == pl.num_programs(2) - 1)
        def _finalize():
            _epilogue(acc_ref[...], p_ref, o_ref)
    return kernel


# ---------------------------------------------------------------------------
# One-time layer preparation (hoisted out of the forward hot path)
# ---------------------------------------------------------------------------
def prepare_linbna_int(lin_weight_int8, bn_shift, bn_add, act_min, act_max):
    """Per-layer, one-time preparation: weight transpose + zero padding of K/N
    to multiples of 128, per-feature parameter packing, and the static output
    dtype decision.  Hoist this out of the per-call path (it would otherwise
    re-read/write the full weight in HBM on every forward).

    NOTE: act_min must be concrete (not a tracer) -- mirrors the module's
    __init__-time `self.pure_positive`."""
    N, K = lin_weight_int8.shape
    K_pad = _round_up(K, 128)
    N_pad = _round_up(N, 128)

    pure_positive = bool(np.all(np.asarray(act_min) >= 0))
    out_dtype = jnp.uint8 if pure_positive else jnp.int8

    wT = jnp.transpose(jnp.asarray(lin_weight_int8, jnp.int8))          # (K, N)
    if (K_pad, N_pad) != (K, N):
        wT = jnp.pad(wT, ((0, K_pad - K), (0, N_pad - N)))              # zero pad (exact)

    def pad1(v):
        v = jnp.asarray(v, jnp.int32)
        return jnp.pad(v, (0, N_pad - N)) if N_pad != N else v

    params = jnp.stack(
        [
            pad1(bn_add),                                               # t
            pad1(jnp.clip(-jnp.asarray(bn_shift, jnp.int32), 0, 31)),   # shift amount (guarded)
            pad1(act_min),
            pad1(act_max),
        ],
        axis=0,
    )                                                                   # (4, N_pad) int32

    return dict(wT=wT, params=params, N=N, K=K, N_pad=N_pad, K_pad=K_pad,
                out_dtype=out_dtype)


# ---------------------------------------------------------------------------
# Forward
# ---------------------------------------------------------------------------
def linbna_int_apply(x_int8, prep, *, tile_m=None, tile_n=None, tile_k=None):
    """x_int8: (B, in_features) int8.  prep: output of prepare_linbna_int.
    Returns (B, out_features) int8 or uint8 (uint8 iff all(act_min >= 0))."""
    # TODO(synk): uint8 activations (previous layer pure-positive) would need a
    # u8 x s8 MXU path; this kernel takes int8 activations like the demo flow.
    assert x_int8.dtype == jnp.int8, x_int8.dtype
    B, K = x_int8.shape
    assert K == prep["K"], (K, prep["K"])
    K_pad, N_pad, N = prep["K_pad"], prep["N_pad"], prep["N"]

    if K_pad != K:
        x_int8 = jnp.pad(x_int8, ((0, 0), (0, K_pad - K)))   # zero pad: exact for the dot

    use_bf16_mxu = _use_bf16_mxu()
    tm, tn, tk, single = _choose_tiles(B, N_pad, K_pad, use_bf16_mxu,
                                       tile_m, tile_n, tile_k)
    assert B % tm == 0 and N_pad % tn == 0, (B, N_pad, tm, tn)
    if not single:
        assert K_pad % tk == 0, (K_pad, tk)

    footprint = _tile_footprint(tm, tn, tk, not single, use_bf16_mxu)
    vmem_limit = int(min(max(footprint * 13 // 10 + (4 << 20), 16 << 20), 56 << 20))

    if single:
        out = pl.pallas_call(
            _make_single_pass_kernel(use_bf16_mxu),
            out_shape=jax.ShapeDtypeStruct((B, N_pad), prep["out_dtype"]),
            grid_spec=pltpu.PrefetchScalarGridSpec(
                num_scalar_prefetch=0,
                grid=(B // tm, N_pad // tn),
                in_specs=[
                    pl.BlockSpec((tm, K_pad), lambda i, j: (i, 0)),   # x strip (int8)
                    pl.BlockSpec((K_pad, tn), lambda i, j: (0, j)),   # W^T strip (int8)
                    pl.BlockSpec((4, tn), lambda i, j: (0, j)),       # packed params (int32)
                ],
                out_specs=pl.BlockSpec((tm, tn), lambda i, j: (i, j)),
            ),
            compiler_params=pltpu.CompilerParams(
                dimension_semantics=("parallel", "parallel"),
                vmem_limit_bytes=vmem_limit,
            ),
        )(x_int8, prep["wT"], prep["params"])
    else:
        out = pl.pallas_call(
            _make_ktiled_kernel(use_bf16_mxu),
            out_shape=jax.ShapeDtypeStruct((B, N_pad), prep["out_dtype"]),
            grid_spec=pltpu.PrefetchScalarGridSpec(
                num_scalar_prefetch=0,
                grid=(B // tm, N_pad // tn, K_pad // tk),
                in_specs=[
                    pl.BlockSpec((tm, tk), lambda i, j, k: (i, k)),
                    pl.BlockSpec((tk, tn), lambda i, j, k: (k, j)),
                    pl.BlockSpec((4, tn), lambda i, j, k: (0, j)),
                ],
                out_specs=pl.BlockSpec((tm, tn), lambda i, j, k: (i, j)),
                scratch_shapes=[pltpu.VMEM((tm, tn), jnp.int32)],
            ),
            compiler_params=pltpu.CompilerParams(
                dimension_semantics=("parallel", "parallel", "arbitrary"),
                vmem_limit_bytes=vmem_limit,
            ),
        )(x_int8, prep["wT"], prep["params"])

    if N_pad != N:
        out = out[:, :N]
    return out


def linbna_int_forward(x_int8, lin_weight_int8, bn_shift, bn_add, act_min, act_max,
                       *, tile_m=None, tile_n=None, tile_k=None):
    """Convenience wrapper.  For repeated calls, hoist prepare_linbna_int()
    out of the hot path and call linbna_int_apply directly."""
    prep = prepare_linbna_int(lin_weight_int8, bn_shift, bn_add, act_min, act_max)
    return linbna_int_apply(x_int8, prep, tile_m=tile_m, tile_n=tile_n, tile_k=tile_k)


# ---------------------------------------------------------------------------
# Pure-JAX reference + self-test
# ---------------------------------------------------------------------------
def _reference(x_int8, lin_weight_int8, bn_shift, bn_add, act_min, act_max):
    acc = x_int8.astype(jnp.int32) @ lin_weight_int8.astype(jnp.int32).T
    acc = acc + bn_add.astype(jnp.int32)[None, :]
    acc = jnp.right_shift(acc, jnp.clip(-bn_shift.astype(jnp.int32), 0, 31)[None, :])
    acc = jnp.clip(acc, act_min.astype(jnp.int32)[None, :],
                   act_max.astype(jnp.int32)[None, :])
    pure_positive = bool(np.all(np.asarray(act_min) >= 0))
    return acc.astype(jnp.uint8 if pure_positive else jnp.int8)


if __name__ == "__main__":
    key = jax.random.PRNGKey(0)
    k1, k2, k3, k4, k5, k6 = jax.random.split(key, 6)

    # ---- Case 1: lane-aligned shapes, signed activation window -> int8 output
    B, IN_F, OUT_F = 64, 256, 256
    x = jax.random.randint(k1, (B, IN_F), -128, 128, dtype=jnp.int32).astype(jnp.int8)
    w = jax.random.randint(k2, (OUT_F, IN_F), -128, 128, dtype=jnp.int32).astype(jnp.int8)
    bn_shift = -jax.random.randint(k3, (OUT_F,), 4, 10, dtype=jnp.int32)   # n <= 0
    bn_add = jax.random.randint(k4, (OUT_F,), -2048, 2048, dtype=jnp.int32)
    act_min_s = jnp.full((OUT_F,), -64, dtype=jnp.int32)
    act_max_s = jnp.full((OUT_F,), 63, dtype=jnp.int32)

    prep = prepare_linbna_int(w, bn_shift, bn_add, act_min_s, act_max_s)   # hoisted prep
    out_s = jax.block_until_ready(linbna_int_apply(x, prep))               # single-pass path
    ref_s = _reference(x, w, bn_shift, bn_add, act_min_s, act_max_s)
    assert out_s.dtype == ref_s.dtype == jnp.int8, (out_s.dtype, ref_s.dtype)
    assert out_s.shape == (B, OUT_F)
    assert bool(jnp.all(out_s == ref_s)), "int8 single-pass path does not match reference"

    # ---- Case 2: non-128-multiple features (exercises K/N padding + output
    #      slice) and a pure-positive window -> uint8 output (fused cast)
    B2, IN2, OUT2 = 32, 200, 200
    x2 = jax.random.randint(k5, (B2, IN2), -128, 128, dtype=jnp.int32).astype(jnp.int8)
    w2 = jax.random.randint(k6, (OUT2, IN2), -128, 128, dtype=jnp.int32).astype(jnp.int8)
    bn_shift2 = -jax.random.randint(k3, (OUT2,), 4, 10, dtype=jnp.int32)
    bn_add2 = jax.random.randint(k4, (OUT2,), -2048, 2048, dtype=jnp.int32)
    act_min_u = jnp.zeros((OUT2,), dtype=jnp.int32)
    act_max_u = jnp.full((OUT2,), 200, dtype=jnp.int32)

    prep2 = prepare_linbna_int(w2, bn_shift2, bn_add2, act_min_u, act_max_u)
    out_u = jax.block_until_ready(linbna_int_apply(x2, prep2))
    ref_u = _reference(x2, w2, bn_shift2, bn_add2, act_min_u, act_max_u)
    assert out_u.dtype == ref_u.dtype == jnp.uint8, (out_u.dtype, ref_u.dtype)
    assert out_u.shape == (B2, OUT2)
    assert bool(jnp.all(out_u == ref_u)), "uint8 padded path does not match reference"

    # ---- Case 3: force the K-tiled accumulator kernel (tile_k < K) to keep the
    #      fallback path exercised / correct
    out_kt = jax.block_until_ready(
        linbna_int_apply(x, prep, tile_m=32, tile_n=128, tile_k=128))
    assert out_kt.dtype == jnp.int8
    assert bool(jnp.all(out_kt == ref_s)), "K-tiled path does not match reference"

    print("KERNEL_OK")
</pallas_src>

<mosaic_0001>
module attributes {stable_mosaic.version = 11 : i64} {
  func.func @kernel(%arg0: i32, %arg1: i32, %arg2: memref<64x256xi8, #tpu.memory_space<vmem>>, %arg3: memref<256x128xi8, #tpu.memory_space<vmem>>, %arg4: memref<4x128xi32, #tpu.memory_space<vmem>>, %arg5: memref<64x128xi8, #tpu.memory_space<vmem>>) attributes {dimension_semantics = [#tpu.dimension_semantics<parallel>, #tpu.dimension_semantics<parallel>], iteration_bounds = array<i64: 1, 2>, scalar_prefetch = 0 : i64, scratch_operands = 0 : i64, tpu.core_type = #tpu.core_type<tc>, window_params = [{transform_indices = @transform_0, window_bounds = array<i64: 64, 256>}, {transform_indices = @transform_1, window_bounds = array<i64: 256, 128>}, {transform_indices = @transform_2, window_bounds = array<i64: 4, 128>}, {transform_indices = @transform_3, window_bounds = array<i64: 64, 128>}]} {
    %c0 = arith.constant 0 : index
    %c0_0 = arith.constant 0 : index
    %0 = vector.load %arg2[%c0, %c0_0] : memref<64x256xi8, #tpu.memory_space<vmem>>, vector<64x256xi8>
    %c0_1 = arith.constant 0 : index
    %c0_2 = arith.constant 0 : index
    %1 = vector.load %arg3[%c0_1, %c0_2] : memref<256x128xi8, #tpu.memory_space<vmem>>, vector<256x128xi8>
    %cst = arith.constant dense<0> : vector<64x128xi32>
    %2 = tpu.matmul %0, %1, %cst {dimension_numbers = #tpu.dot_dimension_numbers<[1], [0], [0], [1], [0, 0, 1, 1], [], []>} : vector<64x256xi8>, vector<256x128xi8>, vector<64x128xi32> -> vector<64x128xi32>
    %c0_3 = arith.constant 0 : index
    %c0_4 = arith.constant 0 : index
    %3 = vector.load %arg4[%c0_3, %c0_4] : memref<4x128xi32, #tpu.memory_space<vmem>>, vector<1x128xi32>
    %4 = vector.broadcast %3 : vector<1x128xi32> to vector<64x128xi32>
    %5 = arith.addi %2, %4 : vector<64x128xi32>
    %c1 = arith.constant 1 : index
    %c0_5 = arith.constant 0 : index
    %6 = vector.load %arg4[%c1, %c0_5] : memref<4x128xi32, #tpu.memory_space<vmem>>, vector<1x128xi32>
    %7 = vector.broadcast %6 : vector<1x128xi32> to vector<64x128xi32>
    %8 = arith.shrsi %5, %7 : vector<64x128xi32>
    %c2 = arith.constant 2 : index
    %c0_6 = arith.constant 0 : index
    %9 = vector.load %arg4[%c2, %c0_6] : memref<4x128xi32, #tpu.memory_space<vmem>>, vector<1x128xi32>
    %c3 = arith.constant 3 : index
    %c0_7 = arith.constant 0 : index
    %10 = vector.load %arg4[%c3, %c0_7] : memref<4x128xi32, #tpu.memory_space<vmem>>, vector<1x128xi32>
    %11 = vector.broadcast %9 : vector<1x128xi32> to vector<64x128xi32>
    %12 = arith.maxsi %11, %8 : vector<64x128xi32>
    %13 = vector.broadcast %10 : vector<1x128xi32> to vector<64x128xi32>
    %14 = arith.minsi %13, %12 : vector<64x128xi32>
    %15 = arith.trunci %14 : vector<64x128xi32> to vector<64x128xi8>
    %c0_8 = arith.constant 0 : index
    %c0_9 = arith.constant 0 : index
    %16 = vector.load %arg5[%c0_8, %c0_9] : memref<64x128xi8, #tpu.memory_space<vmem>>, vector<64x128xi8>
    tpu.vector_store %arg5[%c0_8, %c0_9], %15 {strides = array<i32>} : memref<64x128xi8, #tpu.memory_space<vmem>>, vector<64x128xi8>,
    return
  }
  func.func @transform_0(%arg0: i32, %arg1: i32) -> (i32, i32) {
    %c0_i32 = arith.constant 0 : i32
    %c0_i32_0 = arith.constant 0 : i32
    return %arg0, %c0_i32 : i32, i32
  }
  func.func @transform_1(%arg0: i32, %arg1: i32) -> (i32, i32) {
    %c0_i32 = arith.constant 0 : i32
    %c0_i32_0 = arith.constant 0 : i32
    return %c0_i32, %arg1 : i32, i32
  }
  func.func @transform_2(%arg0: i32, %arg1: i32) -> (i32, i32) {
    %c0_i32 = arith.constant 0 : i32
    %c0_i32_0 = arith.constant 0 : i32
    return %c0_i32, %arg1 : i32, i32
  }
  func.func @transform_3(%arg0: i32, %arg1: i32) -> (i32, i32) {
    %c0_i32 = arith.constant 0 : i32
    return %arg0, %arg1 : i32, i32
  }
}

</mosaic_0001>

<llo_original>
// kernel: tpu_custom_call.1
$region0: #{tpu_custom_call.1}
  #allocation0 [shape = 'u32[]', space=smem, size = 0x4, offset = 0x4, fixed_abs, tag = 'smem constant byte address 0x4 - core index']
  #allocation1 [shape = 'u32[144,128]{1,0:T(1,128)}', space=vmem, size = 0x12000, scoped, tag = 'internal scratch']
  %s0 = inlined_call_operand.hbm [shape: s8[64,256], index: 0, kind: input, shape index: {}]
  %s1 = inlined_call_operand.hbm [shape: s8[256,256], index: 1, kind: input, shape index: {}]
  %s2 = inlined_call_operand.hbm [shape: s32[4,256], index: 2, kind: input, shape index: {}]
  %s3 = inlined_call_operand.hbm [shape: s8[64,256], index: 3, kind: output, shape index: {}]
  %s4 = sld [smem:[#allocation0]]
  $region57: #{tpu_custom_call.1} parent=0
    _
  %s6 = ssub.s32 1, %s4
  %s7 = scalar_select 0, %s6, %s4
  $region1: #{tpu_custom_call.1} parent=0
    #allocation2 [shape = 'u8[16384]{0}', space=vmem, size = 0x4000, scoped, tag = 'input window, operand 0, single buffered']
    #allocation3 [shape = 's32[2]{0}', space=sflag, size = 0x8, scoped, tag = 'scoped memory for tpu_custom_call.1']
    #allocation4 [shape = 's32[2]{0}', space=sflag, size = 0x8, scoped, tag = 'scoped memory for tpu_custom_call.1']
    #allocation5 [shape = 'u8[65536]{0}', space=vmem, size = 0x10000, scoped, tag = 'input window, operand 1']
    #allocation6 [shape = 's32[2]{0}', space=sflag, size = 0x8, scoped, tag = 'scoped memory for tpu_custom_call.1']
    #allocation7 [shape = 'u8[4096]{0}', space=vmem, size = 0x1000, scoped, tag = 'input window, operand 2']
    #allocation8 [shape = 'u8[16384]{0}', space=vmem, size = 0x4000, scoped, tag = 'output window, operand 0']
    %8 = vsyncpa [#allocation3], 0
    %9 = vsyncpa [#allocation6], 0
    %s10 = scalar_lea.sflag [#allocation6], 1
    %11 = vsyncpa %s10, 0
    %12 = vsyncpa [#allocation4], 0
    %s13 = scalar_lea.sflag [#allocation4], 1
    %14 = vsyncpa %s13, 0
    loop: start=0, step=1, limit=4
    $region2: #{tpu_custom_call.1} parent=1 // loop_pre_header
      _
    $region3: #{tpu_custom_call.1} parent=1 // loop_header
      %s16 = sphi 0, %s20
      %p17 = scmp.ge.s32.totalorder %s16, 4
      %s23 = sphi 0, %s35
      %s24 = sphi 0, %s31
      %s25 = sphi 0, %s23
      %s26 = sphi 0, %s24
      %s27 = sphi 0, %s25
      %s28 = sphi 0, %s26
      %s38 = sphi 0, %s40
      %s41 = sphi 0, %s38
      %s42 = sphi 0, %s41
      %s58 = sphi 0, %s42
      %s64 = sphi 0, %s66
      %s67 = sphi 0, %s64
      %s68 = sphi 0, %s67
      %s84 = sphi 0, %s68
      %s90 = sphi 0, %s92
      %s93 = sphi 0, %s90
      %s94 = sphi 0, %s93
      %s110 = sphi 0, %s94
      %s118 = sphi 0, %s120
      %s121 = sphi 0, %s118
      %s122 = sphi 0, %s121
      %s138 = sphi 0, %s122
    $region4: #{tpu_custom_call.1} parent=1 // loop_header_branch
      %19 = sbr.rel (%p17) target = $region8
    $region5: #{tpu_custom_call.1} parent=1 // loop_body
      %s21 = ssub.s32 %s16, 1
      %s22 = ssub.s32 %s16, 2
      %s29 = sadd.s32 1, %s24
      %p30 = scmp.ge.s32.totalorder %s29, 2
      %s31 = scalar_select %p30, 0, %s29
      %s32 = sadd.s32 1, %s23
      %s33 = scalar_select %p30, %s32, %s23
      %p34 = scmp.ge.s32.totalorder %s33, 1
      %s35 = scalar_select %p34, 0, %s33
      %s36 = ssub.s32 %s23, %s35
      %p37 = scmp.eq.s32.totalorder %s36, 0
      %s39 = sadd.s32 %s38, 1
      %s40 = scalar_select %p37, %s38, %s39
      %p43 = pneg %p37
      %p44 = scmp.eq.s32.totalorder %s16, 1
      %p45 = por %p43, %p44
      %p46 = scmp.ne.s32.totalorder %s38, %s41
      %p47 = scmp.eq.s32.totalorder %s16, 0
      %p48 = por %p46, %p47
      %p49 = scmp.ne.s32.totalorder %s38, %s41
      %p50 = scmp.eq.s32.totalorder %s21, 1
      %p51 = por %p49, %p50
      %p52 = scmp.ne.s32.totalorder %s41, %s42
      %p53 = scmp.eq.s32.totalorder %s21, 0
      %p54 = por %p52, %p53
      %p55 = scmp.ne.s32.totalorder %s41, %s42
      %p56 = scmp.eq.s32.totalorder %s22, 1
      %p57 = por %p55, %p56
      %p59 = scmp.ne.s32.totalorder %s42, %s58
      %p60 = scmp.eq.s32.totalorder %s22, 0
      %p61 = por %p59, %p60
      %s62 = ssub.s32 %s24, %s31
      %p63 = scmp.eq.s32.totalorder %s62, 0
      %s65 = sadd.s32 %s64, 1
      %s66 = scalar_select %p63, %s64, %s65
      %p69 = pneg %p63
      %p70 = scmp.eq.s32.totalorder %s16, 1
      %p71 = por %p69, %p70
      %p72 = scmp.ne.s32.totalorder %s64, %s67
      %p73 = scmp.eq.s32.totalorder %s16, 0
      %p74 = por %p72, %p73
      %p75 = scmp.ne.s32.totalorder %s64, %s67
      %p76 = scmp.eq.s32.totalorder %s21, 1
      %p77 = por %p75, %p76
      %p78 = scmp.ne.s32.totalorder %s67, %s68
      %p79 = scmp.eq.s32.totalorder %s21, 0
      %p80 = por %p78, %p79
      %p81 = scmp.ne.s32.totalorder %s67, %s68
      %p82 = scmp.eq.s32.totalorder %s22, 1
      %p83 = por %p81, %p82
      %p85 = scmp.ne.s32.totalorder %s68, %s84
      %p86 = scmp.eq.s32.totalorder %s22, 0
      %p87 = por %p85, %p86
      %s88 = ssub.s32 %s24, %s31
      %p89 = scmp.eq.s32.totalorder %s88, 0
      %s91 = sadd.s32 %s90, 1
      %s92 = scalar_select %p89, %s90, %s91
      %p95 = pneg %p89
      %p96 = scmp.eq.s32.totalorder %s16, 1
      %p97 = por %p95, %p96
      %p98 = scmp.ne.s32.totalorder %s90, %s93
      %p99 = scmp.eq.s32.totalorder %s16, 0
      %p100 = por %p98, %p99
      %p101 = scmp.ne.s32.totalorder %s90, %s93
      %p102 = scmp.eq.s32.totalorder %s21, 1
      %p103 = por %p101, %p102
      %p104 = scmp.ne.s32.totalorder %s93, %s94
      %p105 = scmp.eq.s32.totalorder %s21, 0
      %p106 = por %p104, %p105
      %p107 = scmp.ne.s32.totalorder %s93, %s94
      %p108 = scmp.eq.s32.totalorder %s22, 1
      %p109 = por %p107, %p108
      %p111 = scmp.ne.s32.totalorder %s94, %s110
      %p112 = scmp.eq.s32.totalorder %s22, 0
      %p113 = por %p111, %p112
      %s114 = ssub.s32 %s23, %s35
      %s115 = ssub.s32 %s24, %s31
      %s116 = sor.u32 %s114, %s115
      %p117 = scmp.eq.s32.totalorder %s116, 0
      %s119 = sadd.s32 %s118, 1
      %s120 = scalar_select %p117, %s118, %s119
      %p123 = pneg %p117
      %p124 = scmp.eq.s32.totalorder %s16, 1
      %p125 = por %p123, %p124
      %p126 = scmp.ne.s32.totalorder %s118, %s121
      %p127 = scmp.eq.s32.totalorder %s16, 0
      %p128 = por %p126, %p127
      %p129 = scmp.ne.s32.totalorder %s118, %s121
      %p130 = scmp.eq.s32.totalorder %s21, 1
      %p131 = por %p129, %p130
      %p132 = scmp.ne.s32.totalorder %s121, %s122
      %p133 = scmp.eq.s32.totalorder %s21, 0
      %p134 = por %p132, %p133
      %p135 = scmp.ne.s32.totalorder %s121, %s122
      %p136 = scmp.eq.s32.totalorder %s22, 1
      %p137 = por %p135, %p136
      %p139 = scmp.ne.s32.totalorder %s122, %s138
      %p140 = scmp.eq.s32.totalorder %s22, 0
      %p141 = por %p139, %p140
      %p142 = scmp.le.s32.totalorder 1, %s16
      %p143 = scmp.lt.s32.totalorder %s16, 3
      %p144 = pnand %p142, %p143
      %p145 = pneg %p144
      // Predicated region
      $region9: #{tpu_custom_call.1} parent=5 // pred_check
        _
      $region10: #{tpu_custom_call.1} parent=5 // pred_check_branch
        %147 = sbr.rel (%p144) target = $region12
      $region11: #{tpu_custom_call.1} parent=5 // pred_region
        %s148 = ssub.s32 %s16, 1
        // Predicated region
        $region13: #{tpu_custom_call.1} parent=11 // pred_check
          %p149 = pneg %p54
        $region14: #{tpu_custom_call.1} parent=11 // pred_check_branch
          %151 = sbr.rel (%p149) target = $region16
        $region15: #{tpu_custom_call.1} parent=11 // pred_region
          %s152 = smul.u32 2, %s25
          %s154 = ssub.s32 512, 512
          %155 = vsyncadd [#allocation3], %s154
          %s156 = smul.addr %s152, 2
          %s157 = smul.addr %s156, 128
          %s158 = scalar_lea.hbm %s0, %s157
          %s159 = sshll.u32 [#allocation2], 4
          %s160 = int_to_ptr.vmem [resolvable:$true] %s159
          %165 = dma.hbm_to_vmem [thread:$0]  %s158, 512, %s160, [#allocation3], 256, 256, 16
        $region16: #{tpu_custom_call.1} parent=11 // pred_fallthru
          _
      $region12: #{tpu_custom_call.1} parent=5 // pred_fallthru
        _
      %p166 = scmp.lt.s32.totalorder %s16, 2
      // Predicated region
      $region17: #{tpu_custom_call.1} parent=5 // pred_check
        %p167 = pneg %p166
      $region18: #{tpu_custom_call.1} parent=5 // pred_check_branch
        %169 = sbr.rel (%p167) target = $region20
      $region19: #{tpu_custom_call.1} parent=5 // pred_region
        // Predicated region
        $region21: #{tpu_custom_call.1} parent=19 // pred_check
          %p170 = pneg %p74
        $region22: #{tpu_custom_call.1} parent=19 // pred_check_branch
          %172 = sbr.rel (%p170) target = $region24
        $region23: #{tpu_custom_call.1} parent=19 // pred_region
          %s173 = sand.u32 %s16, 1
          %s174 = scalar_lea.sflag [#allocation6], %s173
          %s175 = sand.u32 %s64, 1
          %s176 = smul.addr %s175, 64
          %s177 = scalar_lea.vmem [#allocation5], %s176
          %s179 = ssub.s32 1024, 1024
          %180 = vsyncadd %s174, %s179
          %s181 = smul.addr %s24, 128
          %s182 = scalar_lea.hbm %s1, %s181
          %s183 = sshll.u32 %s177, 4
          %s184 = int_to_ptr.vmem [resolvable:$true] %s183
          %189 = dma.hbm_to_vmem [thread:$0]  %s182, 1024, %s184, %s174, 256, 128, 8
        $region24: #{tpu_custom_call.1} parent=19 // pred_fallthru
          _
        // Predicated region
        $region25: #{tpu_custom_call.1} parent=19 // pred_check
          %p190 = pneg %p100
        $region26: #{tpu_custom_call.1} parent=19 // pred_check_branch
          %192 = sbr.rel (%p190) target = $region28
        $region27: #{tpu_custom_call.1} parent=19 // pred_region
          %s193 = sand.u32 %s16, 1
          %s194 = scalar_lea.sflag [#allocation6], %s193
          %s195 = sand.u32 %s90, 1
          %s196 = smul.addr %s195, 4
          %s197 = scalar_lea.vmem [#allocation7], %s196
          %s199 = ssub.s32 64, 64
          %200 = vsyncadd %s194, %s199
          %s201 = smul.addr %s24, 64
          %s202 = scalar_lea.hbm %s2, %s201
          %s204 = sshll.u32 %s197, 4
          %s205 = int_to_ptr.vmem [resolvable:$true] %s204
          %207 = dma.hbm_to_vmem [thread:$0]  %s202, 64, %s205, %s194
        $region28: #{tpu_custom_call.1} parent=19 // pred_fallthru
          _
      $region20: #{tpu_custom_call.1} parent=5 // pred_fallthru
        _
      %p208 = scmp.le.s32.totalorder 1, %s16
      %p209 = scmp.lt.s32.totalorder %s16, 3
      %p210 = pnand %p208, %p209
      %p211 = pneg %p210
      // Predicated region
      $region29: #{tpu_custom_call.1} parent=5 // pred_check
        _
      $region30: #{tpu_custom_call.1} parent=5 // pred_check_branch
        %213 = sbr.rel (%p210) target = $region32
      $region31: #{tpu_custom_call.1} parent=5 // pred_region
        %s214 = ssub.s32 %s16, 1
        // Predicated region
        $region33: #{tpu_custom_call.1} parent=31 // pred_check
          %p215 = pneg %p54
        $region34: #{tpu_custom_call.1} parent=31 // pred_check_branch
          %217 = sbr.rel (%p215) target = $region36
        $region35: #{tpu_custom_call.1} parent=31 // pred_region
          %218 = dma.done [#allocation3], 512
        $region36: #{tpu_custom_call.1} parent=31 // pred_fallthru
          _
        %s219 = sand.u32 %s21, 1
        %s220 = scalar_lea.sflag [#allocation6], %s219
        %s221 = sand.u32 %s67, 1
        %s222 = smul.addr %s221, 64
        %s223 = scalar_lea.vmem [#allocation5], %s222
        // Predicated region
        $region37: #{tpu_custom_call.1} parent=31 // pred_check
          %p224 = pneg %p80
        $region38: #{tpu_custom_call.1} parent=31 // pred_check_branch
          %226 = sbr.rel (%p224) target = $region40
        $region39: #{tpu_custom_call.1} parent=31 // pred_region
          %227 = dma.done %s220, 1024
        $region40: #{tpu_custom_call.1} parent=31 // pred_fallthru
          _
        %s228 = sand.u32 %s21, 1
        %s229 = scalar_lea.sflag [#allocation6], %s228
        %s230 = sand.u32 %s93, 1
        %s231 = smul.addr %s230, 4
        %s232 = scalar_lea.vmem [#allocation7], %s231
        // Predicated region
        $region41: #{tpu_custom_call.1} parent=31 // pred_check
          %p233 = pneg %p106
        $region42: #{tpu_custom_call.1} parent=31 // pred_check_branch
          %235 = sbr.rel (%p233) target = $region44
        $region43: #{tpu_custom_call.1} parent=31 // pred_region
          %236 = dma.done %s229, 64
        $region44: #{tpu_custom_call.1} parent=31 // pred_fallthru
          _
        %p237 = pneg %p54
        %p238 = pneg %p51
        %s239 = sand.u32 %s21, 1
        %s240 = scalar_lea.sflag [#allocation6], %s239
        %s241 = sand.u32 %s67, 1
        %s242 = smul.addr %s241, 64
        %s243 = scalar_lea.vmem [#allocation5], %s242
        %p244 = pneg %p80
        %p245 = pneg %p77
        %s246 = sand.u32 %s21, 1
        %s247 = scalar_lea.sflag [#allocation6], %s246
        %s248 = sand.u32 %s93, 1
        %s249 = smul.addr %s248, 4
        %s250 = scalar_lea.vmem [#allocation7], %s249
        %p251 = pneg %p106
        %p252 = pneg %p103
        %p253 = pneg %p134
        %p254 = pneg %p131
        %s255 = sand.u32 %s121, 1
        %s256 = scalar_lea.sflag [#allocation4], %s255
        %s257 = sand.u32 %s121, 1
        %s258 = smul.addr %s257, 16
        %s259 = scalar_lea.vmem [#allocation8], %s258
        %s260 = smul.u32 2, %s25
        %s261 = smul.u32 2, %s25
        %v263 = vld [vmem:[#allocation2] sm:$0xff]
        %v264 = vld [vmem:[#allocation2 + $0x8] sm:$0xff]
        %v265 = vld [vmem:[#allocation2 + $0x10] sm:$0xff]
        %v266 = vld [vmem:[#allocation2 + $0x18] sm:$0xff]
        %v267 = vld [vmem:[%s223] sm:$0xff]
        %v268 = vld [vmem:[%s223 + $0x8] sm:$0xff]
        %v269 = vld [vmem:[%s223 + $0x10] sm:$0xff]
        %v270 = vld [vmem:[%s223 + $0x18] sm:$0xff]
        %v271 = vld [vmem:[%s223 + $0x20] sm:$0xff]
        %v272 = vld [vmem:[%s223 + $0x28] sm:$0xff]
        %v273 = vld [vmem:[%s223 + $0x30] sm:$0xff]
        %v274 = vld [vmem:[%s223 + $0x38] sm:$0xff]
        %v275 = vld [vmem:[%s232] sm:$0x1]
        %v276 = vlaneseq
        %v277 = vshrl.u32 %v276, 7
        %v278 = vsub.s32 0, %v277
        %v279 = vrot.slane %v275, %v278
        %v280 = vunpack.c.l.s8.bf16 %v263
        %v281 = vunpack.c.l.s8.bf16 %v264
        %v282 = vunpack.c.h.s8.bf16 %v263
        %v283 = vunpack.c.h.s8.bf16 %v264
        %v284 = vunpack.c.l.s8.bf16 %v265
        %v285 = vunpack.c.l.s8.bf16 %v266
        %v286 = vunpack.c.h.s8.bf16 %v265
        %v287 = vunpack.c.h.s8.bf16 %v266
        %v288 = vunpack.c.l.s8.bf16 %v267
        %v289 = vunpack.c.h.s8.bf16 %v267
        %v290 = vunpack.c.l.s8.bf16 %v268
        %v291 = vunpack.c.h.s8.bf16 %v268
        %v292 = vunpack.c.l.s8.bf16 %v269
        %v293 = vunpack.c.h.s8.bf16 %v269
        %v294 = vunpack.c.l.s8.bf16 %v270
        %v295 = vunpack.c.h.s8.bf16 %v270
        %v296 = vunpack.c.l.s8.bf16 %v271
        %v297 = vunpack.c.h.s8.bf16 %v271
        %v298 = vunpack.c.l.s8.bf16 %v272
        %v299 = vunpack.c.h.s8.bf16 %v272
        %v300 = vunpack.c.l.s8.bf16 %v273
        %v301 = vunpack.c.h.s8.bf16 %v273
        %v302 = vunpack.c.l.s8.bf16 %v274
        %v303 = vunpack.c.h.s8.bf16 %v274
        %v304 = vcvt.s32.f32 %v279
        %305 = vmatprep.subr.bf16.mxu0 0
        %306 = vmatpush1.bf16.msra.mxu0 %v288
        %307 = vmatprep.subr.bf16.mxu0 0
        %308 = vmatpush1.bf16.msra.mxu0 %v289
        %309 = vmatprep.subr.bf16.mxu0 0
        %310 = vmatpush1.bf16.msra.mxu0 %v290
        %311 = vmatprep.subr.bf16.mxu0 0
        %312 = vmatpush1.bf16.msra.mxu0 %v291
        %313 = vmatprep.subr.bf16.mxu0 0
        %314 = vmatpush1.bf16.msra.mxu0 %v292
        %315 = vmatprep.subr.bf16.mxu0 0
        %316 = vmatpush1.bf16.msra.mxu0 %v293
        %317 = vmatprep.subr.bf16.mxu0 0
        %318 = vmatpush1.bf16.msra.mxu0 %v294
        %319 = vmatprep.subr.bf16.mxu0 0
        %320 = vmatpush1.bf16.msra.mxu0 %v295
        %321 = vmatprep.subr.bf16.mxu0 0
        %322 = vmatpush1.bf16.msra.mxu0 %v296
        %323 = vmatprep.subr.bf16.mxu0 0
        %324 = vmatpush1.bf16.msra.mxu0 %v297
        %325 = vmatprep.subr.bf16.mxu0 0
        %326 = vmatpush1.bf16.msra.mxu0 %v298
        %327 = vmatprep.subr.bf16.mxu0 0
        %328 = vmatpush1.bf16.msra.mxu0 %v299
        %329 = vmatprep.subr.bf16.mxu0 0
        %330 = vmatpush1.bf16.msra.mxu0 %v300
        %331 = vmatprep.subr.bf16.mxu0 0
        %332 = vmatpush1.bf16.msra.mxu0 %v301
        %333 = vmatprep.subr.bf16.mxu0 0
        %334 = vmatpush1.bf16.msra.mxu0 %v302
        %335 = vmatprep.subr.bf16.mxu0 0
        %336 = vmatpush1.bf16.msra.mxu0 %v303
        %337 = vmatprep.mubr.bf16.mxu0 %v281
        %338 = vmatmul.mubr.bf16.gmra.mrb[0].mxu0 %v280
        %v339 = vpop.f32.mrb[0].mxu0
        %v340 = vadd.f32 %v304, %v339
        %v341 = vpop.f32.mrb[0].mxu0
        %v342 = vpop.f32.mrb[0].mxu0
        %v343 = vadd.f32 %v304, %v342
        %v344 = vpop.f32.mrb[0].mxu0
        %345 = vmatprep.mubr.bf16.mxu0 %v283
        %346 = vmatmul.mubr.bf16.gmra.mrb[0].mxu0 %v282
        %v347 = vpop.f32.mrb[0].mxu0
        %v348 = vadd.f32 %v304, %v347
        %v349 = vpop.f32.mrb[0].mxu0
        %v350 = vpop.f32.mrb[0].mxu0
        %v351 = vadd.f32 %v304, %v350
        %v352 = vpop.f32.mrb[0].mxu0
        %353 = vmatprep.mubr.bf16.mxu0 %v285
        %354 = vmatmul.mubr.bf16.gmra.mrb[0].mxu0 %v284
        %v355 = vpop.f32.mrb[0].mxu0
        %v356 = vadd.f32 %v304, %v355
        %v357 = vpop.f32.mrb[0].mxu0
        %v358 = vpop.f32.mrb[0].mxu0
        %v359 = vadd.f32 %v304, %v358
        %v360 = vpop.f32.mrb[0].mxu0
        %361 = vmatprep.mubr.bf16.mxu0 %v287
        %362 = vmatmul.mubr.bf16.gmra.mrb[0].mxu0 %v286
        %v363 = vpop.f32.mrb[0].mxu0
        %v364 = vadd.f32 %v304, %v363
        %v365 = vpop.f32.mrb[0].mxu0
        %v366 = vpop.f32.mrb[0].mxu0
        %v367 = vadd.f32 %v304, %v366
        %v368 = vpop.f32.mrb[0].mxu0
        %369 = vdwg.mxu0
        %v370 = vcvt.f32.s32.to.zero.pseudo %v340
        %v371 = vcvt.f32.s32.to.zero.pseudo %v343
        %v372 = vcvt.f32.s32.to.zero.pseudo %v348
        %v373 = vcvt.f32.s32.to.zero.pseudo %v351
        %v374 = vcvt.f32.s32.to.zero.pseudo %v356
        %v375 = vcvt.f32.s32.to.zero.pseudo %v359
        %v376 = vcvt.f32.s32.to.zero.pseudo %v364
        %v377 = vcvt.f32.s32.to.zero.pseudo %v367
        %v378 = vld [vmem:[%s232 + $0x1] sm:$0x1]
        %v379 = vlaneseq
        %v380 = vshrl.u32 %v379, 7
        %v381 = vsub.s32 0, %v380
        %v382 = vrot.slane %v378, %v381
        %v383 = vshra.s32 %v370, %v382
        %v384 = vshra.s32 %v371, %v382
        %v385 = vshra.s32 %v372, %v382
        %v386 = vshra.s32 %v373, %v382
        %v387 = vshra.s32 %v374, %v382
        %v388 = vshra.s32 %v375, %v382
        %v389 = vshra.s32 %v376, %v382
        %v390 = vshra.s32 %v377, %v382
        %v391 = vld [vmem:[%s232 + $0x2] sm:$0x1]
        %v392 = vld [vmem:[%s232 + $0x3] sm:$0x1]
        %v393 = vlaneseq
        %v394 = vshrl.u32 %v393, 7
        %v395 = vsub.s32 0, %v394
        %v396 = vrot.slane %v391, %v395
        %vm397 = vcmp.gt.s32.totalorder %v396, %v383
        %v398 = vsel %vm397, %v396, %v383
        %vm399 = vcmp.gt.s32.totalorder %v396, %v384
        %v400 = vsel %vm399, %v396, %v384
        %vm401 = vcmp.gt.s32.totalorder %v396, %v385
        %v402 = vsel %vm401, %v396, %v385
        %vm403 = vcmp.gt.s32.totalorder %v396, %v386
        %v404 = vsel %vm403, %v396, %v386
        %vm405 = vcmp.gt.s32.totalorder %v396, %v387
        %v406 = vsel %vm405, %v396, %v387
        %vm407 = vcmp.gt.s32.totalorder %v396, %v388
        %v408 = vsel %vm407, %v396, %v388
        %vm409 = vcmp.gt.s32.totalorder %v396, %v389
        %v410 = vsel %vm409, %v396, %v389
        %vm411 = vcmp.gt.s32.totalorder %v396, %v390
        %v412 = vsel %vm411, %v396, %v390
        %v413 = vlaneseq
        %v414 = vshrl.u32 %v413, 7
        %v415 = vsub.s32 0, %v414
        %v416 = vrot.slane %v392, %v415
        %vm417 = vcmp.lt.s32.totalorder %v416, %v398
        %v418 = vsel %vm417, %v416, %v398
        %vm419 = vcmp.lt.s32.totalorder %v416, %v400
        %v420 = vsel %vm419, %v416, %v400
        %vm421 = vcmp.lt.s32.totalorder %v416, %v402
        %v422 = vsel %vm421, %v416, %v402
        %vm423 = vcmp.lt.s32.totalorder %v416, %v404
        %v424 = vsel %vm423, %v416, %v404
        %vm425 = vcmp.lt.s32.totalorder %v416, %v406
        %v426 = vsel %vm425, %v416, %v406
        %vm427 = vcmp.lt.s32.totalorder %v416, %v408
        %v428 = vsel %vm427, %v416, %v408
        %vm429 = vcmp.lt.s32.totalorder %v416, %v410
        %v430 = vsel %vm429, %v416, %v410
        %vm431 = vcmp.lt.s32.totalorder %v416, %v412
        %v432 = vsel %vm431, %v416, %v412
        %v433 = vpack.c.b16 %v420, %v418
        %v434 = vpack.c.b16 %v424, %v422
        %v435 = vpack.c.b8 %v434, %v433
        %v436 = vpack.c.b16 %v428, %v426
        %v437 = vpack.c.b16 %v432, %v430
        %v438 = vpack.c.b8 %v437, %v436
        %439 = vst [vmem:[%s259] sm:$0xff] %v435
        %440 = vst [vmem:[%s259 + $0x8] sm:$0xff] %v438
        %s441 = sand.u32 %s121, 1
        %s442 = scalar_lea.sflag [#allocation4], %s441
        %s443 = sand.u32 %s121, 1
        %s444 = smul.addr %s443, 16
        %s445 = scalar_lea.vmem [#allocation8], %s444
        // Predicated region
        $region45: #{tpu_custom_call.1} parent=31 // pred_check
          %p446 = pneg %p131
        $region46: #{tpu_custom_call.1} parent=31 // pred_check_branch
          %448 = sbr.rel (%p446) target = $region48
        $region47: #{tpu_custom_call.1} parent=31 // pred_region
          %s449 = smul.u32 2, %s25
          %s451 = ssub.s32 256, 256
          %452 = vsyncadd %s442, %s451
          %s453 = smul.addr %s449, 2
          %s454 = sadd.s32 %s26, %s453
          %s455 = smul.addr %s454, 128
          %s456 = scalar_lea.hbm %s3, %s455
          %s457 = sshll.u32 %s445, 4
          %s458 = int_to_ptr.vmem [resolvable:$true] %s457
          %463 = dma.vmem_to_hbm [thread:$0]  %s458, 256, %s456, %s442, 128, 256, 8
        $region48: #{tpu_custom_call.1} parent=31 // pred_fallthru
          _
      $region32: #{tpu_custom_call.1} parent=5 // pred_fallthru
        _
      %p464 = scmp.le.s32.totalorder 2, %s16
      // Predicated region
      $region49: #{tpu_custom_call.1} parent=5 // pred_check
        %p465 = pneg %p464
      $region50: #{tpu_custom_call.1} parent=5 // pred_check_branch
        %467 = sbr.rel (%p465) target = $region52
      $region51: #{tpu_custom_call.1} parent=5 // pred_region
        %s468 = ssub.s32 %s16, 2
        // Predicated region
        $region53: #{tpu_custom_call.1} parent=51 // pred_check
          %p469 = pneg %p137
        $region54: #{tpu_custom_call.1} parent=51 // pred_check_branch
          %471 = sbr.rel (%p469) target = $region56
        $region55: #{tpu_custom_call.1} parent=51 // pred_region
          %s472 = sand.u32 %s122, 1
          %s473 = scalar_lea.sflag [#allocation4], %s472
          %s474 = sand.u32 %s122, 1
          %s475 = smul.addr %s474, 16
          %s476 = scalar_lea.vmem [#allocation8], %s475
          %477 = dma.done %s473, 256
        $region56: #{tpu_custom_call.1} parent=51 // pred_fallthru
          _
      $region52: #{tpu_custom_call.1} parent=5 // pred_fallthru
        _
    $region6: #{tpu_custom_call.1} parent=1 // loop_footer
      %s20 = sadd.s32 1, %s16
    $region7: #{tpu_custom_call.1} parent=1 // loop_footer_branch
      %15 = sbr.rel target = $region3
    $region8: #{tpu_custom_call.1} parent=1 // loop_exit
      _
    %478 = vsyncpa [#allocation3], 1
    %s479 = scalar_lea.sflag [#allocation3], 1
    %480 = vsyncpa %s479, 1
    %481 = vsyncpa [#allocation6], 1
    %s482 = scalar_lea.sflag [#allocation6], 1
    %483 = vsyncpa %s482, 1
    %484 = vsyncpa [#allocation4], 1
    %s485 = scalar_lea.sflag [#allocation4], 1
    %486 = vsyncpa %s485, 1

</llo_original>
